<compile_context>
chip_gen: v5e
topology: v5e:2x2
jax: 0.10.0
libtpu: 0.0.40
codegen_flags: <defaults>
</compile_context>

<pallas_src>
import functools

import jax
import jax.numpy as jnp
from jax.experimental import pallas as pl
from jax.experimental.pallas import tpu as pltpu


def fused_kernel(x_ref, o_ref, *, W):
    """x_ref / o_ref: (bp, H*W) lane-dense blocks of flattened (N*C) planes."""
    x = x_ref[...]
    bp, L = x.shape
    Lc = L - 1        # flat positions that have a "+1 column" neighbour
    Lr = L - 1 - W    # flat positions that also have a "+1 row" neighbour

    # 2x2 / stride-1 average pool as two shifted adds in the flat (lane) layout:
    #   pooled[p] = 0.25 * (x[p] + x[p+1] + x[p+W] + x[p+W+1])
    # Positions whose flat neighbours cross a row boundary (w == W-1) or sit in
    # the last image row (h == H-1) are garbage, but exactly those positions
    # are cropped away by the wrapper.
    s = x[:, :Lc] + x[:, 1:]                  # column pairs   (bp, L-1)
    pooled = (s[:, :Lr] + s[:, W:]) * 0.25    # + row pairs    (bp, L-1-W)

    # avg_pool_1 / avg_pool_2 (kernel_size=1) are identities on the valid
    # region (see TODO above), so v2 == v3 == pooled.
    v6 = jnp.tanh(pooled) + pooled * pooled   # tanh -> EUP slot, hidden by VPU work

    o_ref[:, :Lr] = x[:, :Lr] * v6
    # Keep the (cropped-away) tail of the output defined.
    o_ref[:, Lr:] = jnp.zeros((bp, L - Lr), x.dtype)


def _planes_per_block(planes, lane_len, budget_bytes=8 << 20):
    """Planes per grid step, sized from the *padded* VMEM footprint.

    One lane-dense f32 plane-row pads to cdiv(L,128)*128 lanes; with
    double-buffered input + output a block of bp planes costs
    4 * round_up(bp, 8) * padded_row_bytes.
    """
    row_bytes = pl.cdiv(lane_len, 128) * 128 * 4  # f32, lane-padded

    def footprint(bp):
        return 4 * (pl.cdiv(bp, 8) * 8) * row_bytes

    if footprint(planes) <= budget_bytes:
        return planes                             # single block -> grid=(1,)
    bp = max(8, (budget_bytes // (4 * row_bytes)) // 8 * 8)  # multiple of 8
    return min(bp, planes)


def model_forward(x):
    """x: (N, C, H, W) float32 -> (N, C, H-1, W-1) float32."""
    N, C, H, W = x.shape
    Ho, Wo = H - 1, W - 1
    planes = N * C
    L = H * W
    xf = x.reshape(planes, L)                     # lane-dense: spatial dims -> lanes

    bp = _planes_per_block(planes, L)             # planes per grid step
    grid = (pl.cdiv(planes, bp),)                 # == (1,) for the demo shape

    out = pl.pallas_call(
        functools.partial(fused_kernel, W=W),
        out_shape=jax.ShapeDtypeStruct((planes, L), x.dtype),
        grid_spec=pltpu.PrefetchScalarGridSpec(
            num_scalar_prefetch=0,
            grid=grid,
            in_specs=[pl.BlockSpec((bp, L), lambda i: (i, 0))],
            out_specs=pl.BlockSpec((bp, L), lambda i: (i, 0)),
        ),
        compiler_params=pltpu.CompilerParams(
            dimension_semantics=("parallel",),
            vmem_limit_bytes=32 * 1024 * 1024,
        ),
    )(xf)

    # Single strided crop to the pooled spatial size, done once in the wrapper.
    return out.reshape(N, C, H, W)[..., :Ho, :Wo]


def reference(x):
    v1 = 0.25 * (
        x[..., :-1, :-1] + x[..., 1:, :-1] + x[..., :-1, 1:] + x[..., 1:, 1:]
    )
    v6 = jnp.tanh(v1) + v1 * v1
    return x[..., :-1, :-1] * v6


if __name__ == "__main__":
    key = jax.random.PRNGKey(0)
    # Small shapes consistent with the module's intended 18x18 spatial input.
    x1 = jax.random.normal(key, (2, 3, 18, 18), dtype=jnp.float32)

    out = jax.block_until_ready(model_forward(x1))

    ref = reference(x1)
    assert out.shape == (2, 3, 17, 17), out.shape
    assert jnp.allclose(out, ref, atol=1e-5, rtol=1e-5), "mismatch vs reference"

    print("KERNEL_OK")
</pallas_src>

<mosaic_0001>
module attributes {stable_mosaic.version = 11 : i64} {
  func.func @fused_kernel(%arg0: i32, %arg1: memref<6x324xf32, #tpu.memory_space<vmem>>, %arg2: memref<6x324xf32, #tpu.memory_space<vmem>>) attributes {dimension_semantics = [#tpu.dimension_semantics<parallel>], iteration_bounds = array<i64: 1>, scalar_prefetch = 0 : i64, scratch_operands = 0 : i64, tpu.core_type = #tpu.core_type<tc>, window_params = [{transform_indices = @transform_0, window_bounds = array<i64: 6, 324>}, {transform_indices = @transform_1, window_bounds = array<i64: 6, 324>}]} {
    %c0 = arith.constant 0 : index
    %c0_0 = arith.constant 0 : index
    %0 = vector.load %arg1[%c0, %c0_0] : memref<6x324xf32, #tpu.memory_space<vmem>>, vector<6x324xf32>
    %1 = vector.extract_strided_slice %0 {offsets = [0, 0], sizes = [6, 323], strides = [1, 1]} : vector<6x324xf32> to vector<6x323xf32>
    %2 = vector.extract_strided_slice %0 {offsets = [0, 1], sizes = [6, 323], strides = [1, 1]} : vector<6x324xf32> to vector<6x323xf32>
    %3 = arith.addf %1, %2 : vector<6x323xf32>
    %4 = vector.extract_strided_slice %3 {offsets = [0, 0], sizes = [6, 305], strides = [1, 1]} : vector<6x323xf32> to vector<6x305xf32>
    %5 = vector.extract_strided_slice %3 {offsets = [0, 18], sizes = [6, 305], strides = [1, 1]} : vector<6x323xf32> to vector<6x305xf32>
    %6 = arith.addf %4, %5 : vector<6x305xf32>
    %cst = arith.constant 2.500000e-01 : f32
    %7 = vector.broadcast %cst : f32 to vector<6x305xf32>
    %8 = arith.mulf %6, %7 : vector<6x305xf32>
    %9 = math.tanh %8 : vector<6x305xf32>
    %10 = arith.mulf %8, %8 : vector<6x305xf32>
    %11 = arith.addf %9, %10 : vector<6x305xf32>
    %12 = vector.extract_strided_slice %0 {offsets = [0, 0], sizes = [6, 305], strides = [1, 1]} : vector<6x324xf32> to vector<6x305xf32>
    %13 = arith.mulf %12, %11 : vector<6x305xf32>
    %c0_1 = arith.constant 0 : index
    %c0_2 = arith.constant 0 : index
    %14 = vector.load %arg2[%c0_1, %c0_2] : memref<6x324xf32, #tpu.memory_space<vmem>>, vector<6x305xf32>
    tpu.vector_store %arg2[%c0_1, %c0_2], %13 {strides = array<i32>} : memref<6x324xf32, #tpu.memory_space<vmem>>, vector<6x305xf32>,
    %cst_3 = arith.constant 0.000000e+00 : f32
    %15 = vector.broadcast %cst_3 : f32 to vector<6x19xf32>
    %c0_4 = arith.constant 0 : index
    %c305 = arith.constant 305 : index
    %16 = vector.load %arg2[%c0_4, %c305] : memref<6x324xf32, #tpu.memory_space<vmem>>, vector<6x19xf32>
    tpu.vector_store %arg2[%c0_4, %c305], %15 {strides = array<i32>} : memref<6x324xf32, #tpu.memory_space<vmem>>, vector<6x19xf32>,
    return
  }
  func.func @transform_0(%arg0: i32) -> (i32, i32) {
    %c0_i32 = arith.constant 0 : i32
    %c0_i32_0 = arith.constant 0 : i32
    return %arg0, %c0_i32 : i32, i32
  }
  func.func @transform_1(%arg0: i32) -> (i32, i32) {
    %c0_i32 = arith.constant 0 : i32
    %c0_i32_0 = arith.constant 0 : i32
    return %arg0, %c0_i32 : i32, i32
  }
}

</mosaic_0001>

<llo_original>
// kernel: tpu_custom_call.1
$region0: #{tpu_custom_call.1}
  #allocation0 [shape = 'u32[]', space=smem, size = 0x4, offset = 0x4, fixed_abs, tag = 'smem constant byte address 0x4 - core index']
  #allocation1 [shape = 'u32[72,128]{1,0:T(1,128)}', space=vmem, size = 0x9000, scoped, tag = 'internal scratch']
  %s0 = inlined_call_operand.hbm [shape: f32[6,324], index: 0, kind: input, shape index: {}]
  %s1 = inlined_call_operand.hbm [shape: f32[6,324], index: 1, kind: output, shape index: {}]
  %s2 = sld [smem:[#allocation0]]
  $region18: #{tpu_custom_call.1} parent=0
    _
  %s4 = ssub.s32 1, %s2
  %s5 = scalar_select 0, %s4, %s2
  $region1: #{tpu_custom_call.1} parent=0
    #allocation2 [shape = 'u8[12288]{0}', space=vmem, size = 0x3000, scoped, tag = 'input window, operand 0, single buffered']
    #allocation3 [shape = 's32[1]{0}', space=sflag, size = 0x4, scoped, tag = 'scoped memory for tpu_custom_call.1']
    #allocation4 [shape = 's32[1]{0}', space=sflag, size = 0x4, scoped, tag = 'scoped memory for tpu_custom_call.1']
    #allocation5 [shape = 'u8[12288]{0}', space=vmem, size = 0x3000, scoped, tag = 'output window, operand 0, single buffered']
    %6 = vsyncpa [#allocation3], 0
    %7 = vsyncpa [#allocation4], 0
    // Predicated region
    $region2: #{tpu_custom_call.1} parent=1 // pred_check
      _
    $region3: #{tpu_custom_call.1} parent=1 // pred_check_branch
      %9 = sbr.rel (0) target = $region5
    $region4: #{tpu_custom_call.1} parent=1 // pred_region
      %11 = vsyncadd [#allocation3], 0
      %s13 = sshll.u32 %s0, 4
      %s14 = int_to_ptr.hbm [resolvable:$true] %s13
      %s15 = sshll.u32 [#allocation2], 4
      %s16 = int_to_ptr.vmem [resolvable:$true] %s15
      %18 = dma.hbm_to_vmem [thread:$0]  %s14, 384, %s16, [#allocation3]
    $region5: #{tpu_custom_call.1} parent=1 // pred_fallthru
      _
    // Predicated region
    $region6: #{tpu_custom_call.1} parent=1 // pred_check
      _
    $region7: #{tpu_custom_call.1} parent=1 // pred_check_branch
      %20 = sbr.rel (0) target = $region9
    $region8: #{tpu_custom_call.1} parent=1 // pred_region
      %22 = dma.done [#allocation3], 384
    $region9: #{tpu_custom_call.1} parent=1 // pred_fallthru
      _
    %v23 = vld [vmem:[#allocation2] sm:$0x3f]
    %v24 = vld [vmem:[#allocation2 + $0x8] sm:$0x3f]
    %v25 = vld [vmem:[#allocation2 + $0x10] sm:$0x3f]
    %29 = vrot.lane.b32.xlu0 %v23, 127
    %v30 = vpop.permute.xlu0 %29
    %31 = vrot.lane.b32.xlu0 %v24, 127
    %v32 = vpop.permute.xlu0 %31
    %33 = vrot.lane.b32.xlu0 %v25, 127
    %v34 = vpop.permute.xlu0 %33
    %vm35 = vcmask 1039360
    %v36 = vsel %vm35, %v30, %v32
    %v37 = vsel %vm35, %v32, %v34
    %v41 = vadd.f32 %v23, %v36
    %v42 = vadd.f32 %v24, %v37
    %v43 = vadd.f32 %v25, %v34
    %47 = vrot.lane.b32.xlu0 %v41, 110
    %v48 = vpop.permute.xlu0 %47
    %49 = vrot.lane.b32.xlu0 %v42, 110
    %v50 = vpop.permute.xlu0 %49
    %51 = vrot.lane.b32.xlu0 %v43, 110
    %v52 = vpop.permute.xlu0 %51
    %vm53 = vcmask 900096
    %v54 = vsel %vm53, %v48, %v50
    %v55 = vsel %vm53, %v50, %v52
    %v59 = vadd.f32 %v41, %v54
    %v60 = vadd.f32 %v42, %v55
    %v61 = vadd.f32 %v43, %v52
    %v62 = vmul.f32 %v59, 0.25
    %v63 = vmul.f32 %v60, 0.25
    %v64 = vmul.f32 %v61, 0.25
    %v65 = vtanh.pop %v62
    %v66 = vtanh.pop %v63
    %v67 = vtanh.pop %v64
    %v68 = vmul.f32 %v62, %v62
    %v69 = vmul.f32 %v63, %v63
    %v70 = vmul.f32 %v64, %v64
    %v71 = vadd.f32 %v65, %v68
    %v72 = vadd.f32 %v66, %v69
    %v73 = vadd.f32 %v67, %v70
    %v74 = vmul.f32 %v23, %v71
    %v75 = vmul.f32 %v24, %v72
    %v76 = vmul.f32 %v25, %v73
    %77 = vst [vmem:[#allocation5] sm:$0x3f] %v74
    %78 = vst [vmem:[#allocation5 + $0x8] sm:$0x3f] %v75
    %vm79 = vcmask 398336
    %80 = vst.msk [vmem:[#allocation5 + $0x10] sm:$0x3f] %vm79, %v76
    %vm81 = vcmask 554376
    %82 = vst.msk [vmem:[#allocation5 + $0x10] sm:$0x3f] %vm81, 0.0
    // Predicated region
    $region10: #{tpu_custom_call.1} parent=1 // pred_check
      _
    $region11: #{tpu_custom_call.1} parent=1 // pred_check_branch
      %84 = sbr.rel (0) target = $region13
    $region12: #{tpu_custom_call.1} parent=1 // pred_region
      %86 = vsyncadd [#allocation4], 0
      %s88 = sshll.u32 [#allocation5], 4
      %s89 = int_to_ptr.vmem [resolvable:$true] %s88
      %s90 = sshll.u32 %s1, 4
      %s91 = int_to_ptr.hbm [resolvable:$true] %s90
      %93 = dma.vmem_to_hbm [thread:$0]  %s89, 384, %s91, [#allocation4]
    $region13: #{tpu_custom_call.1} parent=1 // pred_fallthru
      _
    // Predicated region
    $region14: #{tpu_custom_call.1} parent=1 // pred_check
      _
    $region15: #{tpu_custom_call.1} parent=1 // pred_check_branch
      %95 = sbr.rel (0) target = $region17
    $region16: #{tpu_custom_call.1} parent=1 // pred_region
      %97 = dma.done [#allocation4], 384
    $region17: #{tpu_custom_call.1} parent=1 // pred_fallthru
      _
    %98 = vsyncpa [#allocation3], 1
    %99 = vsyncpa [#allocation4], 1

</llo_original>
